<compile_context>
chip_gen: v7x
topology: tpu7x:2x2x1
jax: 0.10.0
libtpu: 0.0.40
codegen_flags: <defaults>
</compile_context>

<pallas_src>
import numpy as np
import jax
import jax.numpy as jnp
from jax.experimental import pallas as pl
from jax.experimental.pallas import tpu as pltpu


def _round_up(x, m):
    return (x + m - 1) // m * m


def _pick_tj(h, wd, target_rows=512):
    """Largest TJ dividing h with TJ*wd <= target_rows and nice sublane alignment."""
    for pref in (16, 8):
        best = None
        for tj in range(1, h + 1):
            if h % tj:
                continue
            tm = tj * wd
            if tm <= target_rows and tm % pref == 0:
                best = tj
        if best is not None:
            return best
    return h


# ------------------------------- stage 1 kernel ------------------------------
# Per output parity (p, q) the transposed conv is a plain matmul with K = 4*Cin:
#   up[p,q] (TM, Cout_pad) = A[p,q] (TM, 4*Cin) @ Wm[p,q] (4*Cin, Cout_pad)
# The kernel also emits per-tile per-channel partial BN moments for both the conv
# channels and the skip channels (skip is read here only for its statistics).

def _upconv_stats_kernel(a_ref, w_ref, skip_ref, conv_ref, stats_ref):
    # bf16 x bf16 -> f32 accumulation on the MXU.
    up = jnp.dot(a_ref[...], w_ref[...], preferred_element_type=jnp.float32)
    conv_ref[...] = up.astype(conv_ref.dtype)            # bf16 intermediate

    sk = skip_ref[...]                                    # (TM, Cskip_pad) f32
    # Two lane-dense stats stores: row 0 = sums, row 1 = sums of squares.
    stats_ref[0:1, :] = jnp.concatenate(
        [jnp.sum(up, axis=0, keepdims=True),
         jnp.sum(sk, axis=0, keepdims=True)], axis=-1)
    stats_ref[1:2, :] = jnp.concatenate(
        [jnp.sum(up * up, axis=0, keepdims=True),
         jnp.sum(sk * sk, axis=0, keepdims=True)], axis=-1)


# ------------------------------- stage 2 kernel ------------------------------
# BN (batch stats folded into scale/shift) + ReLU + fused channel concat + parity
# interleave.  Output block layout is (TJ, 2[p], Wd, 2*Ctot_pad) with the width
# parity q packed along lanes, so NHWC is a free reshape afterwards.

def _make_bn_relu_interleave_kernel(cout_pad, cskip_pad):
    ctot_pad = cout_pad + cskip_pad

    def kernel(conv_ref, skip_ref, scale_ref, shift_ref, out_ref):
        # conv_ref : (2, 2, TJ, Wd, Cout_pad)   bf16   (p, q, j, i, c)
        # skip_ref : (TJ, 2, Wd, 2*Cskip_pad)   f32    (j, p, i, (q, c))
        # out_ref  : (TJ, 2, Wd, 2*Ctot_pad)    f32    (j, p, i, (q, c))
        scale = scale_ref[...]                            # (1, Ctot_pad)
        shift = shift_ref[...]
        sc_cv = scale[:, :cout_pad].reshape(1, 1, cout_pad)
        sh_cv = shift[:, :cout_pad].reshape(1, 1, cout_pad)
        sc_sk = scale[:, cout_pad:].reshape(1, 1, cskip_pad)
        sh_sk = shift[:, cout_pad:].reshape(1, 1, cskip_pad)

        for p in range(2):
            for q in range(2):
                base = q * ctot_pad
                cv = conv_ref[p, q].astype(jnp.float32)   # (TJ, Wd, Cout_pad)
                out_ref[:, p, :, base:base + cout_pad] = (
                    jnp.maximum(cv * sc_cv + sh_cv, 0.0))
                sk = skip_ref[:, p, :, q * cskip_pad:(q + 1) * cskip_pad]
                out_ref[:, p, :, base + cout_pad:base + ctot_pad] = (
                    jnp.maximum(sk * sc_sk + sh_sk, 0.0))

    return kernel


# -------------------------------- UNetUp forward -----------------------------

def unet_up_forward(x, skip, W, b, gamma, beta, *, eps=1e-5):
    """x: (N, Cin, H, W) NCHW; skip: (N, Cskip, 2H, 2W) NCHW.
    W: ConvTranspose2d weight (Cin, Cout, 4, 4); b: (Cout,) (ignored: exactly
    cancelled by the following train-mode BatchNorm). Returns NCHW output."""
    del b  # per-channel constant -> removed by BN batch-mean subtraction

    N, Cin, H, Wd = x.shape
    Cout = W.shape[1]
    Cskip = skip.shape[1]
    OH, OW = 2 * H, 2 * Wd
    Cout_pad = _round_up(Cout, 128)        # independently lane-padded segments
    Cskip_pad = _round_up(Cskip, 128)
    Ctot_pad = Cout_pad + Cskip_pad
    Kp = 4 * Cin                           # per-parity contraction size
    M = N * H * Wd                         # per-parity output rows
    TJ = _pick_tj(H, Wd, 512)              # row tile = TJ image rows (TJ | H)
    TM = TJ * Wd                           # rows per tile (no M padding needed)
    NT = M // TM                           # = N * (H // TJ)
    f32, bf16 = jnp.float32, jnp.bfloat16

    # ---- wrapper glue: bf16 per-parity im2col + weight rearrangement ----
    # TODO(synk): load the 4 taps in-kernel from a single padded NHWC x to avoid
    # materializing the 4-parity im2col in HBM.
    x_pad = jnp.pad(jnp.transpose(x, (0, 2, 3, 1)).astype(bf16),
                    ((0, 0), (1, 1), (1, 1), (0, 0)))
    A_list, W_list = [], []
    for p in (0, 1):
        for q in (0, 1):
            taps = [x_pad[:, p + a:p + a + H, q + b:q + b + Wd, :]
                    for a in (0, 1) for b in (0, 1)]
            A_list.append(jnp.stack(taps, axis=3).reshape(M, Kp))         # K=(a,b,ci)
            wtaps = [W[:, :, 3 - p - 2 * a, 3 - q - 2 * b]
                     for a in (0, 1) for b in (0, 1)]                     # (Cin, Cout)
            W_list.append(jnp.stack(wtaps, axis=0).reshape(Kp, Cout))
    A = jnp.stack(A_list, axis=0).reshape(2, 2, M, Kp)                    # bf16
    Wm = jnp.stack(W_list, axis=0).reshape(2, 2, Kp, Cout)
    Wm = jnp.pad(Wm, ((0, 0), (0, 0), (0, 0), (0, Cout_pad - Cout))).astype(bf16)

    # skip stays in its natural NHWC order (no parity rearrangement needed):
    skip_nhwc = jnp.pad(jnp.transpose(skip, (0, 2, 3, 1)).astype(f32),
                        ((0, 0), (0, 0), (0, 0), (0, Cskip_pad - Cskip)))
    skip_flat = skip_nhwc.reshape(N * OH * OW, Cskip_pad)     # stage-1 stats view
    skip_q = skip_nhwc.reshape(N, H, 2, Wd, 2 * Cskip_pad)    # stage-2 view (free)

    # ---- stage 1: per-parity transposed-conv matmuls + partial BN statistics ----
    conv, part_stats = pl.pallas_call(
        _upconv_stats_kernel,
        out_shape=(jax.ShapeDtypeStruct((2, 2, M, Cout_pad), bf16),
                   jax.ShapeDtypeStruct((2, 2, NT, 2, Ctot_pad), f32)),
        grid=(2, 2, NT),
        in_specs=[
            pl.BlockSpec((None, None, TM, Kp), lambda p, q, t: (p, q, t, 0)),
            pl.BlockSpec((None, None, Kp, Cout_pad), lambda p, q, t: (p, q, 0, 0)),
            # disjoint cover of all N*OH*OW skip rows across the whole grid:
            pl.BlockSpec((TM, Cskip_pad),
                         lambda p, q, t: ((p * 2 + q) * NT + t, 0)),
        ],
        out_specs=(
            pl.BlockSpec((None, None, TM, Cout_pad), lambda p, q, t: (p, q, t, 0)),
            pl.BlockSpec((None, None, None, 2, Ctot_pad),
                         lambda p, q, t: (p, q, t, 0, 0)),
        ),
        compiler_params=pltpu.CompilerParams(
            dimension_semantics=("parallel", "parallel", "parallel")),
    )(A, Wm, skip_flat)

    # ---- tiny scalar reduction -> fold BN (batch stats) into scale/shift ----
    stats = jnp.sum(part_stats, axis=(0, 1, 2))           # (2, Ctot_pad)
    count = float(N * OH * OW)
    mean = stats[0] / count
    var = jnp.maximum(stats[1] / count - mean * mean, 0.0)
    gamma_pad = jnp.concatenate(
        [jnp.pad(gamma[:Cout].astype(f32), (0, Cout_pad - Cout)),
         jnp.pad(gamma[Cout:].astype(f32), (0, Cskip_pad - Cskip))])
    beta_pad = jnp.concatenate(
        [jnp.pad(beta[:Cout].astype(f32), (0, Cout_pad - Cout)),
         jnp.pad(beta[Cout:].astype(f32), (0, Cskip_pad - Cskip))])
    inv = jax.lax.rsqrt(var + eps)
    scale = (gamma_pad * inv).reshape(1, Ctot_pad)
    shift = (beta_pad - mean * gamma_pad * inv).reshape(1, Ctot_pad)

    # ---- stage 2: BN + ReLU + fused concat + parity interleave (out BlockSpec) ----
    conv_v = conv.reshape(2, 2, N, H, Wd, Cout_pad)        # free reshape
    kernel2 = _make_bn_relu_interleave_kernel(Cout_pad, Cskip_pad)
    y = pl.pallas_call(
        kernel2,
        out_shape=jax.ShapeDtypeStruct((N, H, 2, Wd, 2 * Ctot_pad), f32),
        grid=(N, H // TJ),
        in_specs=[
            pl.BlockSpec((2, 2, None, TJ, Wd, Cout_pad),
                         lambda n, jt: (0, 0, n, jt, 0, 0)),
            pl.BlockSpec((None, TJ, 2, Wd, 2 * Cskip_pad),
                         lambda n, jt: (n, jt, 0, 0, 0)),
            pl.BlockSpec((1, Ctot_pad), lambda n, jt: (0, 0)),
            pl.BlockSpec((1, Ctot_pad), lambda n, jt: (0, 0)),
        ],
        out_specs=pl.BlockSpec((None, TJ, 2, Wd, 2 * Ctot_pad),
                               lambda n, jt: (n, jt, 0, 0, 0)),
        compiler_params=pltpu.CompilerParams(
            dimension_semantics=("parallel", "parallel")),
    )(conv_v, skip_q, scale, shift)

    # ---- parity interleave is now a free reshape; strip padding; NCHW for PyTorch ----
    y_nhwc = y.reshape(N, OH, OW, Ctot_pad)
    out_nhwc = jnp.concatenate(
        [y_nhwc[..., :Cout], y_nhwc[..., Cout_pad:Cout_pad + Cskip]], axis=-1)
    # TODO(synk): return out_nhwc directly if the consumer accepts NHWC.
    return jnp.transpose(out_nhwc, (0, 3, 1, 2))


# -------------------------------- numpy reference ----------------------------

def ref_forward(x, skip, W, b):
    N, Cin, H, Wd = x.shape
    Cout = W.shape[1]
    OH, OW = 2 * H, 2 * Wd
    up = np.tile(b.reshape(1, Cout, 1, 1), (N, 1, OH, OW)).astype(np.float64)
    for ih in range(H):
        for iw in range(Wd):
            for kh in range(4):
                for kw in range(4):
                    oh = ih * 2 - 1 + kh
                    ow = iw * 2 - 1 + kw
                    if 0 <= oh < OH and 0 <= ow < OW:
                        up[:, :, oh, ow] += x[:, :, ih, iw].astype(np.float64) @ W[:, :, kh, kw]
    cat = np.concatenate([up, skip.astype(np.float64)], axis=1)
    mean = cat.mean(axis=(0, 2, 3), keepdims=True)
    var = cat.var(axis=(0, 2, 3), keepdims=True)   # biased, as PyTorch training-mode BN
    y = (cat - mean) / np.sqrt(var + 1e-5)
    return np.maximum(y, 0.0)


# ------------------------------------- main -----------------------------------

if __name__ == "__main__":
    N, in_size, out_size, skip_channels = 2, 8, 8, 4
    H = Wd = 8
    OH, OW = 2 * H, 2 * Wd

    key = jax.random.PRNGKey(0)
    kx, ks, kw, kb = jax.random.split(key, 4)
    x = jax.random.normal(kx, (N, in_size, H, Wd), jnp.float32)
    skip = jax.random.normal(ks, (N, skip_channels, OH, OW), jnp.float32)
    W = jax.random.normal(kw, (in_size, out_size, 4, 4), jnp.float32) * 0.1  # ConvT weight
    b = jax.random.normal(kb, (out_size,), jnp.float32) * 0.1                # ConvT bias
    gamma = jnp.ones((out_size + skip_channels,), jnp.float32)               # BN defaults
    beta = jnp.zeros((out_size + skip_channels,), jnp.float32)

    out = unet_up_forward(x, skip, W, b, gamma, beta)
    out = jax.block_until_ready(out)

    ref = ref_forward(np.asarray(x), np.asarray(skip), np.asarray(W), np.asarray(b))
    assert out.shape == (N, out_size + skip_channels, OH, OW)
    # bf16 matmul inputs + bf16 intermediate with f32 stats/accumulation
    # -> a few 1e-3 of post-BN error (deliberate precision tradeoff).
    np.testing.assert_allclose(np.asarray(out), ref, atol=3e-2, rtol=3e-2)

    print("KERNEL_OK")
</pallas_src>

<mosaic_0001>
module attributes {stable_mosaic.version = 11 : i64} {
  func.func @_upconv_stats_kernel(%arg0: i32, %arg1: i32, %arg2: i32, %arg3: memref<1x1x64x32xbf16, #tpu.memory_space<vmem>>, %arg4: memref<1x1x32x128xbf16, #tpu.memory_space<vmem>>, %arg5: memref<64x128xf32, #tpu.memory_space<vmem>>, %arg6: memref<1x1x64x128xbf16, #tpu.memory_space<vmem>>, %arg7: memref<1x1x1x2x256xf32, #tpu.memory_space<vmem>>) attributes {dimension_semantics = [#tpu.dimension_semantics<parallel>, #tpu.dimension_semantics<parallel>, #tpu.dimension_semantics<parallel>], iteration_bounds = array<i64: 2, 2, 2>, scalar_prefetch = 0 : i64, scratch_operands = 0 : i64, tpu.core_type = #tpu.core_type<tc>, window_params = [{transform_indices = @transform_0, window_bounds = array<i64: 1, 1, 64, 32>}, {transform_indices = @transform_1, window_bounds = array<i64: 1, 1, 32, 128>}, {transform_indices = @transform_2, window_bounds = array<i64: 64, 128>}, {transform_indices = @transform_3, window_bounds = array<i64: 1, 1, 64, 128>}, {transform_indices = @transform_4, window_bounds = array<i64: 1, 1, 1, 2, 256>}]} {
    %c0 = arith.constant 0 : index
    %c0_0 = arith.constant 0 : index
    %c0_1 = arith.constant 0 : index
    %c0_2 = arith.constant 0 : index
    %0 = vector.load %arg3[%c0, %c0_0, %c0_1, %c0_2] : memref<1x1x64x32xbf16, #tpu.memory_space<vmem>>, vector<1x1x64x32xbf16>
    %1 = vector.shape_cast %0 : vector<1x1x64x32xbf16> to vector<64x32xbf16>
    %c0_3 = arith.constant 0 : index
    %c0_4 = arith.constant 0 : index
    %c0_5 = arith.constant 0 : index
    %c0_6 = arith.constant 0 : index
    %2 = vector.load %arg4[%c0_3, %c0_4, %c0_5, %c0_6] : memref<1x1x32x128xbf16, #tpu.memory_space<vmem>>, vector<1x1x32x128xbf16>
    %3 = vector.shape_cast %2 : vector<1x1x32x128xbf16> to vector<32x128xbf16>
    %cst = arith.constant dense<0.000000e+00> : vector<64x128xf32>
    %4 = tpu.matmul %1, %3, %cst {dimension_numbers = #tpu.dot_dimension_numbers<[1], [0], [0], [1], [0, 0, 1, 1], [], []>} : vector<64x32xbf16>, vector<32x128xbf16>, vector<64x128xf32> -> vector<64x128xf32>
    %5 = arith.truncf %4 : vector<64x128xf32> to vector<64x128xbf16>
    %c0_7 = arith.constant 0 : index
    %c0_8 = arith.constant 0 : index
    %c0_9 = arith.constant 0 : index
    %c0_10 = arith.constant 0 : index
    %6 = vector.load %arg6[%c0_7, %c0_8, %c0_9, %c0_10] : memref<1x1x64x128xbf16, #tpu.memory_space<vmem>>, vector<1x1x64x128xbf16>
    %7 = vector.shape_cast %6 : vector<1x1x64x128xbf16> to vector<64x128xbf16>
    %8 = vector.shape_cast %5 : vector<64x128xbf16> to vector<1x1x64x128xbf16>
    tpu.vector_store %arg6[%c0_7, %c0_8, %c0_9, %c0_10], %8 {strides = array<i32>} : memref<1x1x64x128xbf16, #tpu.memory_space<vmem>>, vector<1x1x64x128xbf16>,
    %c0_11 = arith.constant 0 : index
    %c0_12 = arith.constant 0 : index
    %9 = vector.load %arg5[%c0_11, %c0_12] : memref<64x128xf32, #tpu.memory_space<vmem>>, vector<64x128xf32>
    %cst_13 = arith.constant dense<0.000000e+00> : vector<128xf32>
    %10 = vector.multi_reduction <add>, %4, %cst_13 [0] : vector<64x128xf32> to vector<128xf32>
    %11 = vector.shape_cast %10 : vector<128xf32> to vector<1x128xf32>
    %cst_14 = arith.constant dense<0.000000e+00> : vector<128xf32>
    %12 = vector.multi_reduction <add>, %9, %cst_14 [0] : vector<64x128xf32> to vector<128xf32>
    %13 = vector.shape_cast %12 : vector<128xf32> to vector<1x128xf32>
    %14 = tpu.concatenate %11, %13 in 1 : vector<1x128xf32>, vector<1x128xf32> -> vector<1x256xf32>
    %c0_15 = arith.constant 0 : index
    %c0_16 = arith.constant 0 : index
    %c0_17 = arith.constant 0 : index
    %c0_18 = arith.constant 0 : index
    %c0_19 = arith.constant 0 : index
    %15 = vector.load %arg7[%c0_15, %c0_16, %c0_17, %c0_18, %c0_19] : memref<1x1x1x2x256xf32, #tpu.memory_space<vmem>>, vector<1x1x1x1x256xf32>
    %16 = vector.shape_cast %15 : vector<1x1x1x1x256xf32> to vector<1x256xf32>
    %17 = vector.shape_cast %14 : vector<1x256xf32> to vector<1x1x1x1x256xf32>
    tpu.vector_store %arg7[%c0_15, %c0_16, %c0_17, %c0_18, %c0_19], %17 {strides = array<i32>} : memref<1x1x1x2x256xf32, #tpu.memory_space<vmem>>, vector<1x1x1x1x256xf32>,
    %18 = arith.mulf %4, %4 : vector<64x128xf32>
    %cst_20 = arith.constant dense<0.000000e+00> : vector<128xf32>
    %19 = vector.multi_reduction <add>, %18, %cst_20 [0] : vector<64x128xf32> to vector<128xf32>
    %20 = vector.shape_cast %19 : vector<128xf32> to vector<1x128xf32>
    %21 = arith.mulf %9, %9 : vector<64x128xf32>
    %cst_21 = arith.constant dense<0.000000e+00> : vector<128xf32>
    %22 = vector.multi_reduction <add>, %21, %cst_21 [0] : vector<64x128xf32> to vector<128xf32>
    %23 = vector.shape_cast %22 : vector<128xf32> to vector<1x128xf32>
    %24 = tpu.concatenate %20, %23 in 1 : vector<1x128xf32>, vector<1x128xf32> -> vector<1x256xf32>
    %c0_22 = arith.constant 0 : index
    %c0_23 = arith.constant 0 : index
    %c0_24 = arith.constant 0 : index
    %c1 = arith.constant 1 : index
    %c0_25 = arith.constant 0 : index
    %25 = vector.load %arg7[%c0_22, %c0_23, %c0_24, %c1, %c0_25] : memref<1x1x1x2x256xf32, #tpu.memory_space<vmem>>, vector<1x1x1x1x256xf32>
    %26 = vector.shape_cast %25 : vector<1x1x1x1x256xf32> to vector<1x256xf32>
    %27 = vector.shape_cast %24 : vector<1x256xf32> to vector<1x1x1x1x256xf32>
    tpu.vector_store %arg7[%c0_22, %c0_23, %c0_24, %c1, %c0_25], %27 {strides = array<i32>} : memref<1x1x1x2x256xf32, #tpu.memory_space<vmem>>, vector<1x1x1x1x256xf32>,
    return
  }
  func.func @transform_0(%arg0: i32, %arg1: i32, %arg2: i32) -> (i32, i32, i32, i32) {
    %c0_i32 = arith.constant 0 : i32
    %c0_i32_0 = arith.constant 0 : i32
    return %arg0, %arg1, %arg2, %c0_i32 : i32, i32, i32, i32
  }
  func.func @transform_1(%arg0: i32, %arg1: i32, %arg2: i32) -> (i32, i32, i32, i32) {
    %c0_i32 = arith.constant 0 : i32
    %c0_i32_0 = arith.constant 0 : i32
    %c0_i32_1 = arith.constant 0 : i32
    return %arg0, %arg1, %c0_i32, %c0_i32_0 : i32, i32, i32, i32
  }
  func.func @transform_2(%arg0: i32, %arg1: i32, %arg2: i32) -> (i32, i32) {
    %c2_i32 = arith.constant 2 : i32
    %0 = arith.muli %arg0, %c2_i32 : i32
    %1 = arith.addi %0, %arg1 : i32
    %c2_i32_0 = arith.constant 2 : i32
    %2 = arith.muli %1, %c2_i32_0 : i32
    %3 = arith.addi %2, %arg2 : i32
    %c0_i32 = arith.constant 0 : i32
    %c0_i32_1 = arith.constant 0 : i32
    return %3, %c0_i32 : i32, i32
  }
  func.func @transform_3(%arg0: i32, %arg1: i32, %arg2: i32) -> (i32, i32, i32, i32) {
    %c0_i32 = arith.constant 0 : i32
    %c0_i32_0 = arith.constant 0 : i32
    return %arg0, %arg1, %arg2, %c0_i32 : i32, i32, i32, i32
  }
  func.func @transform_4(%arg0: i32, %arg1: i32, %arg2: i32) -> (i32, i32, i32, i32, i32) {
    %c0_i32 = arith.constant 0 : i32
    %c0_i32_0 = arith.constant 0 : i32
    %c0_i32_1 = arith.constant 0 : i32
    return %arg0, %arg1, %arg2, %c0_i32, %c0_i32_0 : i32, i32, i32, i32, i32
  }
}

</mosaic_0001>

<llo_original>
// kernel: tpu_custom_call.1
$region0: #{tpu_custom_call.1}
  #allocation0 [shape = 'u32[]', space=smem, size = 0x4, offset = 0x4, fixed_abs, tag = 'smem constant byte address 0x4 - core index']
  #allocation1 [shape = 'u32[144,128]{1,0:T(1,128)}', space=vmem, size = 0x12000, scoped, tag = 'internal scratch']
  %s0 = inlined_call_operand.vmem [shape: bf16[2,2,128,32], index: 0, kind: input, shape index: {}]
  %s1 = inlined_call_operand.vmem [shape: bf16[2,2,32,128], index: 1, kind: input, shape index: {}]
  %s2 = inlined_call_operand.hbm [shape: f32[512,128], index: 2, kind: input, shape index: {}]
  %s3 = inlined_call_operand.hbm [shape: bf16[2,2,128,128], index: 3, kind: output, shape index: {0}]
  %s4 = inlined_call_operand.hbm [shape: f32[2,2,2,2,256], index: 4, kind: output, shape index: {1}]
  %5 = xla_tuple %s3, %s4
  %s6 = sld [smem:[#allocation0]]
  $region57: #{tpu_custom_call.1} parent=0
    _
  %s8 = ssub.s32 1, %s6
  %s9 = scalar_select 0, %s8, %s6
  $region1: #{tpu_custom_call.1} parent=0
    #allocation2 [shape = 'u8[65536]{0}', space=vmem, size = 0x10000, scoped, tag = 'input window, operand 2']
    #allocation3 [shape = 's32[2]{0}', space=sflag, size = 0x8, scoped, tag = 'scoped memory for tpu_custom_call.1']
    #allocation4 [shape = 's32[2]{0}', space=sflag, size = 0x8, scoped, tag = 'scoped memory for tpu_custom_call.1']
    #allocation5 [shape = 'u8[32768]{0}', space=vmem, size = 0x8000, scoped, tag = 'output window, operand 0']
    #allocation6 [shape = 'u8[4096]{0}', space=vmem, size = 0x1000, scoped, tag = 'output window, operand 1']
    #allocation7 [shape = 's32[2]{0}', space=sflag, size = 0x8, scoped, tag = 'scoped memory for tpu_custom_call.1']
    %10 = vsyncpa [#allocation3], 0
    %s11 = scalar_lea.sflag [#allocation3], 1
    %12 = vsyncpa %s11, 0
    %13 = vsyncpa [#allocation4], 0
    %s14 = scalar_lea.sflag [#allocation4], 1
    %15 = vsyncpa %s14, 0
    %16 = vsyncpa [#allocation7], 0
    %s17 = scalar_lea.sflag [#allocation7], 1
    %18 = vsyncpa %s17, 0
    loop: start=0, step=1, limit=10
    $region2: #{tpu_custom_call.1} parent=1 // loop_pre_header
      _
    $region3: #{tpu_custom_call.1} parent=1 // loop_header
      %s20 = sphi 0, %s24
      %p21 = scmp.ge.s32.totalorder %s20, 10
      %s27 = sphi 0, %s46
      %s28 = sphi 0, %s42
      %s29 = sphi 0, %s38
      %s30 = sphi 0, %s27
      %s31 = sphi 0, %s28
      %s32 = sphi 0, %s29
      %s33 = sphi 0, %s30
      %s34 = sphi 0, %s31
      %s35 = sphi 0, %s32
      %s53 = sphi 0, %s55
      %s56 = sphi 0, %s53
      %s57 = sphi 0, %s56
      %s73 = sphi 0, %s57
      %s81 = sphi 0, %s83
      %s84 = sphi 0, %s81
      %s85 = sphi 0, %s84
      %s101 = sphi 0, %s85
      %s115 = sphi 0, %s117
      %s118 = sphi 0, %s115
      %s119 = sphi 0, %s118
      %s135 = sphi 0, %s119
      %s145 = sphi 0, %s147
      %s148 = sphi 0, %s145
      %s149 = sphi 0, %s148
      %s165 = sphi 0, %s149
      %s175 = sphi 0, %s177
      %s178 = sphi 0, %s175
      %s179 = sphi 0, %s178
      %s195 = sphi 0, %s179
    $region4: #{tpu_custom_call.1} parent=1 // loop_header_branch
      %23 = sbr.rel (%p21) target = $region8
    $region5: #{tpu_custom_call.1} parent=1 // loop_body
      %s25 = ssub.s32 %s20, 1
      %s26 = ssub.s32 %s20, 2
      %s36 = sadd.s32 1, %s29
      %p37 = scmp.ge.s32.totalorder %s36, 2
      %s38 = scalar_select %p37, 0, %s36
      %s39 = sadd.s32 1, %s28
      %s40 = scalar_select %p37, %s39, %s28
      %p41 = scmp.ge.s32.totalorder %s40, 2
      %s42 = scalar_select %p41, 0, %s40
      %s43 = sadd.s32 1, %s27
      %s44 = scalar_select %p41, %s43, %s27
      %p45 = scmp.ge.s32.totalorder %s44, 2
      %s46 = scalar_select %p45, 0, %s44
      %s47 = ssub.s32 %s27, %s46
      %s48 = ssub.s32 %s28, %s42
      %s49 = sor.u32 %s47, %s48
      %s50 = ssub.s32 %s29, %s38
      %s51 = sor.u32 %s49, %s50
      %p52 = scmp.eq.s32.totalorder %s51, 0
      %s54 = sadd.s32 %s53, 1
      %s55 = scalar_select %p52, %s53, %s54
      %p58 = pneg %p52
      %p59 = scmp.eq.s32.totalorder %s20, 7
      %p60 = por %p58, %p59
      %p61 = scmp.ne.s32.totalorder %s53, %s56
      %p62 = scmp.eq.s32.totalorder %s20, 0
      %p63 = por %p61, %p62
      %p64 = scmp.ne.s32.totalorder %s53, %s56
      %p65 = scmp.eq.s32.totalorder %s25, 7
      %p66 = por %p64, %p65
      %p67 = scmp.ne.s32.totalorder %s56, %s57
      %p68 = scmp.eq.s32.totalorder %s25, 0
      %p69 = por %p67, %p68
      %p70 = scmp.ne.s32.totalorder %s56, %s57
      %p71 = scmp.eq.s32.totalorder %s26, 7
      %p72 = por %p70, %p71
      %p74 = scmp.ne.s32.totalorder %s57, %s73
      %p75 = scmp.eq.s32.totalorder %s26, 0
      %p76 = por %p74, %p75
      %s77 = ssub.s32 %s27, %s46
      %s78 = ssub.s32 %s28, %s42
      %s79 = sor.u32 %s77, %s78
      %p80 = scmp.eq.s32.totalorder %s79, 0
      %s82 = sadd.s32 %s81, 1
      %s83 = scalar_select %p80, %s81, %s82
      %p86 = pneg %p80
      %p87 = scmp.eq.s32.totalorder %s20, 7
      %p88 = por %p86, %p87
      %p89 = scmp.ne.s32.totalorder %s81, %s84
      %p90 = scmp.eq.s32.totalorder %s20, 0
      %p91 = por %p89, %p90
      %p92 = scmp.ne.s32.totalorder %s81, %s84
      %p93 = scmp.eq.s32.totalorder %s25, 7
      %p94 = por %p92, %p93
      %p95 = scmp.ne.s32.totalorder %s84, %s85
      %p96 = scmp.eq.s32.totalorder %s25, 0
      %p97 = por %p95, %p96
      %p98 = scmp.ne.s32.totalorder %s84, %s85
      %p99 = scmp.eq.s32.totalorder %s26, 7
      %p100 = por %p98, %p99
      %p102 = scmp.ne.s32.totalorder %s85, %s101
      %p103 = scmp.eq.s32.totalorder %s26, 0
      %p104 = por %p102, %p103
      %s105 = smul.u32 %s27, 2
      %s106 = sadd.s32 %s105, %s28
      %s107 = smul.u32 %s106, 2
      %s108 = sadd.s32 %s107, %s29
      %s109 = smul.u32 %s46, 2
      %s110 = sadd.s32 %s109, %s42
      %s111 = smul.u32 %s110, 2
      %s112 = sadd.s32 %s111, %s38
      %s113 = ssub.s32 %s108, %s112
      %p114 = scmp.eq.s32.totalorder %s113, 0
      %s116 = sadd.s32 %s115, 1
      %s117 = scalar_select %p114, %s115, %s116
      %p120 = pneg %p114
      %p121 = scmp.eq.s32.totalorder %s20, 7
      %p122 = por %p120, %p121
      %p123 = scmp.ne.s32.totalorder %s115, %s118
      %p124 = scmp.eq.s32.totalorder %s20, 0
      %p125 = por %p123, %p124
      %p126 = scmp.ne.s32.totalorder %s115, %s118
      %p127 = scmp.eq.s32.totalorder %s25, 7
      %p128 = por %p126, %p127
      %p129 = scmp.ne.s32.totalorder %s118, %s119
      %p130 = scmp.eq.s32.totalorder %s25, 0
      %p131 = por %p129, %p130
      %p132 = scmp.ne.s32.totalorder %s118, %s119
      %p133 = scmp.eq.s32.totalorder %s26, 7
      %p134 = por %p132, %p133
      %p136 = scmp.ne.s32.totalorder %s119, %s135
      %p137 = scmp.eq.s32.totalorder %s26, 0
      %p138 = por %p136, %p137
      %s139 = ssub.s32 %s27, %s46
      %s140 = ssub.s32 %s28, %s42
      %s141 = sor.u32 %s139, %s140
      %s142 = ssub.s32 %s29, %s38
      %s143 = sor.u32 %s141, %s142
      %p144 = scmp.eq.s32.totalorder %s143, 0
      %s146 = sadd.s32 %s145, 1
      %s147 = scalar_select %p144, %s145, %s146
      %p150 = pneg %p144
      %p151 = scmp.eq.s32.totalorder %s20, 7
      %p152 = por %p150, %p151
      %p153 = scmp.ne.s32.totalorder %s145, %s148
      %p154 = scmp.eq.s32.totalorder %s20, 0
      %p155 = por %p153, %p154
      %p156 = scmp.ne.s32.totalorder %s145, %s148
      %p157 = scmp.eq.s32.totalorder %s25, 7
      %p158 = por %p156, %p157
      %p159 = scmp.ne.s32.totalorder %s148, %s149
      %p160 = scmp.eq.s32.totalorder %s25, 0
      %p161 = por %p159, %p160
      %p162 = scmp.ne.s32.totalorder %s148, %s149
      %p163 = scmp.eq.s32.totalorder %s26, 7
      %p164 = por %p162, %p163
      %p166 = scmp.ne.s32.totalorder %s149, %s165
      %p167 = scmp.eq.s32.totalorder %s26, 0
      %p168 = por %p166, %p167
      %s169 = ssub.s32 %s27, %s46
      %s170 = ssub.s32 %s28, %s42
      %s171 = sor.u32 %s169, %s170
      %s172 = ssub.s32 %s29, %s38
      %s173 = sor.u32 %s171, %s172
      %p174 = scmp.eq.s32.totalorder %s173, 0
      %s176 = sadd.s32 %s175, 1
      %s177 = scalar_select %p174, %s175, %s176
      %p180 = pneg %p174
      %p181 = scmp.eq.s32.totalorder %s20, 7
      %p182 = por %p180, %p181
      %p183 = scmp.ne.s32.totalorder %s175, %s178
      %p184 = scmp.eq.s32.totalorder %s20, 0
      %p185 = por %p183, %p184
      %p186 = scmp.ne.s32.totalorder %s175, %s178
      %p187 = scmp.eq.s32.totalorder %s25, 7
      %p188 = por %p186, %p187
      %p189 = scmp.ne.s32.totalorder %s178, %s179
      %p190 = scmp.eq.s32.totalorder %s25, 0
      %p191 = por %p189, %p190
      %p192 = scmp.ne.s32.totalorder %s178, %s179
      %p193 = scmp.eq.s32.totalorder %s26, 7
      %p194 = por %p192, %p193
      %p196 = scmp.ne.s32.totalorder %s179, %s195
      %p197 = scmp.eq.s32.totalorder %s26, 0
      %p198 = por %p196, %p197
      %p199 = scmp.le.s32.totalorder 1, %s20
      %p200 = scmp.lt.s32.totalorder %s20, 9
      %p201 = pnand %p199, %p200
      %p202 = pneg %p201
      // Predicated region
      $region9: #{tpu_custom_call.1} parent=5 // pred_check
        _
      $region10: #{tpu_custom_call.1} parent=5 // pred_check_branch
        %204 = sbr.rel (%p201) target = $region12
      $region11: #{tpu_custom_call.1} parent=5 // pred_region
        %s205 = ssub.s32 %s20, 1
      $region12: #{tpu_custom_call.1} parent=5 // pred_fallthru
        _
      %p206 = scmp.lt.s32.totalorder %s20, 8
      // Predicated region
      $region13: #{tpu_custom_call.1} parent=5 // pred_check
        %p207 = pneg %p206
      $region14: #{tpu_custom_call.1} parent=5 // pred_check_branch
        %209 = sbr.rel (%p207) target = $region16
      $region15: #{tpu_custom_call.1} parent=5 // pred_region
        // Predicated region
        $region17: #{tpu_custom_call.1} parent=15 // pred_check
          %p210 = pneg %p63
        $region18: #{tpu_custom_call.1} parent=15 // pred_check_branch
          %212 = sbr.rel (%p210) target = $region20
        $region19: #{tpu_custom_call.1} parent=15 // pred_region
          %s213 = smul.u32 8, %s29
          %p214 = scmp.lt.s32.totalorder %s27, 1
          %s215 = scalar_select %p214, %s27, 1
          %p216 = scmp.lt.s32.totalorder %s28, 1
          %s217 = scalar_select %p216, %s28, 1
          %p218 = scmp.lt.s32.totalorder %s213, 15
          %s219 = scalar_select %p218, %s213, 15
          %s220 = smul.addr %s217, 16
          %s221 = sadd.s32 %s219, %s220
          %s222 = smul.addr %s215, 32
          %s223 = sadd.s32 %s221, %s222
          %s224 = smul.addr %s223, 4
          %s225 = scalar_lea.vmem %s0, %s224
          %s226 = smul.u32 8, %s29
        $region20: #{tpu_custom_call.1} parent=15 // pred_fallthru
          _
        // Predicated region
        $region21: #{tpu_custom_call.1} parent=15 // pred_check
          %p227 = pneg %p91
        $region22: #{tpu_custom_call.1} parent=15 // pred_check_branch
          %229 = sbr.rel (%p227) target = $region24
        $region23: #{tpu_custom_call.1} parent=15 // pred_region
          %p230 = scmp.lt.s32.totalorder %s27, 1
          %s231 = scalar_select %p230, %s27, 1
          %p232 = scmp.lt.s32.totalorder %s28, 1
          %s233 = scalar_select %p232, %s28, 1
          %s234 = smul.addr %s233, 4
          %s235 = smul.addr %s231, 8
          %s236 = sadd.s32 %s234, %s235
          %s237 = smul.addr %s236, 4
          %s238 = scalar_lea.vmem %s1, %s237
        $region24: #{tpu_custom_call.1} parent=15 // pred_fallthru
          _
        // Predicated region
        $region25: #{tpu_custom_call.1} parent=15 // pred_check
          %p239 = pneg %p125
        $region26: #{tpu_custom_call.1} parent=15 // pred_check_branch
          %241 = sbr.rel (%p239) target = $region28
        $region27: #{tpu_custom_call.1} parent=15 // pred_region
          %s242 = sand.u32 %s115, 1
          %s243 = scalar_lea.sflag [#allocation3], %s242
          %s244 = sand.u32 %s115, 1
          %s245 = smul.addr %s244, 64
          %s246 = scalar_lea.vmem [#allocation2], %s245
          %s247 = smul.u32 %s27, 2
          %s248 = sadd.s32 %s247, %s28
          %s249 = smul.u32 %s248, 2
          %s250 = sadd.s32 %s249, %s29
          %s251 = smul.u32 8, %s250
          %s253 = ssub.s32 1024, 1024
          %254 = vsyncadd %s243, %s253
          %s255 = smul.addr %s251, 128
          %s256 = scalar_lea.hbm %s2, %s255
          %s257 = sshll.u32 %s246, 4
          %s258 = int_to_ptr.vmem [resolvable:$true] %s257
          %263 = dma.hbm_to_vmem [thread:$0]  %s256, 1024, %s258, %s243, 128, 128, 8
        $region28: #{tpu_custom_call.1} parent=15 // pred_fallthru
          _
      $region16: #{tpu_custom_call.1} parent=5 // pred_fallthru
        _
      %p264 = scmp.le.s32.totalorder 1, %s20
      %p265 = scmp.lt.s32.totalorder %s20, 9
      %p266 = pnand %p264, %p265
      %p267 = pneg %p266
      // Predicated region
      $region29: #{tpu_custom_call.1} parent=5 // pred_check
        _
      $region30: #{tpu_custom_call.1} parent=5 // pred_check_branch
        %269 = sbr.rel (%p266) target = $region32
      $region31: #{tpu_custom_call.1} parent=5 // pred_region
        %s270 = ssub.s32 %s20, 1
        %s271 = sand.u32 %s118, 1
        %s272 = scalar_lea.sflag [#allocation3], %s271
        %s273 = sand.u32 %s118, 1
        %s274 = smul.addr %s273, 64
        %s275 = scalar_lea.vmem [#allocation2], %s274
        // Predicated region
        $region33: #{tpu_custom_call.1} parent=31 // pred_check
          %p276 = pneg %p131
        $region34: #{tpu_custom_call.1} parent=31 // pred_check_branch
          %278 = sbr.rel (%p276) target = $region36
        $region35: #{tpu_custom_call.1} parent=31 // pred_region
          %279 = dma.done %s272, 1024
        $region36: #{tpu_custom_call.1} parent=31 // pred_fallthru
          _
        %s280 = smul.u32 8, %s32
        %p281 = scmp.lt.s32.totalorder %s30, 1
        %s282 = scalar_select %p281, %s30, 1
        %p283 = scmp.lt.s32.totalorder %s31, 1
        %s284 = scalar_select %p283, %s31, 1
        %p285 = scmp.lt.s32.totalorder %s280, 15
        %s286 = scalar_select %p285, %s280, 15
        %s287 = smul.addr %s284, 16
        %s288 = sadd.s32 %s286, %s287
        %s289 = smul.addr %s282, 32
        %s290 = sadd.s32 %s288, %s289
        %s291 = smul.addr %s290, 4
        %s292 = scalar_lea.vmem %s0, %s291
        %p293 = pneg %p69
        %p294 = pneg %p66
        %p295 = scmp.lt.s32.totalorder %s30, 1
        %s296 = scalar_select %p295, %s30, 1
        %p297 = scmp.lt.s32.totalorder %s31, 1
        %s298 = scalar_select %p297, %s31, 1
        %s299 = smul.addr %s298, 4
        %s300 = smul.addr %s296, 8
        %s301 = sadd.s32 %s299, %s300
        %s302 = smul.addr %s301, 4
        %s303 = scalar_lea.vmem %s1, %s302
        %p304 = pneg %p97
        %p305 = pneg %p94
        %s306 = sand.u32 %s118, 1
        %s307 = scalar_lea.sflag [#allocation3], %s306
        %s308 = sand.u32 %s118, 1
        %s309 = smul.addr %s308, 64
        %s310 = scalar_lea.vmem [#allocation2], %s309
        %p311 = pneg %p131
        %p312 = pneg %p128
        %p313 = pneg %p161
        %p314 = pneg %p158
        %s315 = sand.u32 %s148, 1
        %s316 = scalar_lea.sflag [#allocation4], %s315
        %s317 = sand.u32 %s148, 1
        %s318 = smul.addr %s317, 32
        %s319 = scalar_lea.vmem [#allocation5], %s318
        %p320 = pneg %p191
        %p321 = pneg %p188
        %s322 = sand.u32 %s178, 1
        %s323 = scalar_lea.sflag [#allocation7], %s322
        %s324 = sand.u32 %s178, 1
        %s325 = smul.addr %s324, 4
        %s326 = scalar_lea.vmem [#allocation6], %s325
        %s327 = smul.u32 8, %s32
        %p328 = scmp.lt.s32.totalorder %s30, 1
        %s329 = scalar_select %p328, %s30, 1
        %p330 = scmp.lt.s32.totalorder %s31, 1
        %s331 = scalar_select %p330, %s31, 1
        %p332 = scmp.lt.s32.totalorder %s327, 15
        %s333 = scalar_select %p332, %s327, 15
        %s334 = smul.addr %s331, 16
        %s335 = sadd.s32 %s333, %s334
        %s336 = smul.addr %s329, 32
        %s337 = sadd.s32 %s335, %s336
        %s338 = smul.addr %s337, 4
        %s339 = scalar_lea.vmem %s0, %s338
        %s340 = smul.u32 8, %s32
        %p341 = scmp.lt.s32.totalorder %s30, 1
        %s342 = scalar_select %p341, %s30, 1
        %p343 = scmp.lt.s32.totalorder %s31, 1
        %s344 = scalar_select %p343, %s31, 1
        %s345 = smul.addr %s344, 4
        %s346 = smul.addr %s342, 8
        %s347 = sadd.s32 %s345, %s346
        %s348 = smul.addr %s347, 4
        %s349 = scalar_lea.vmem %s1, %s348
        %s350 = smul.u32 %s30, 2
        %s351 = sadd.s32 %s350, %s31
        %s352 = smul.u32 %s351, 2
        %s353 = sadd.s32 %s352, %s32
        %s354 = smul.u32 8, %s353
        %s355 = smul.u32 8, %s32
        %v357 = vld [vmem:[%s339] sm:$0xf]
        %v358 = vld [vmem:[%s339 + $0x4] sm:$0xf]
        %v359 = vld [vmem:[%s339 + $0x8] sm:$0xf]
        %v360 = vld [vmem:[%s339 + $0xc] sm:$0xf]
        %v361 = vld [vmem:[%s339 + $0x10] sm:$0xf]
        %v362 = vld [vmem:[%s339 + $0x14] sm:$0xf]
        %v363 = vld [vmem:[%s339 + $0x18] sm:$0xf]
        %v364 = vld [vmem:[%s339 + $0x1c] sm:$0xf]
        %v365 = vld [vmem:[%s349] sm:$0xf]
        %v366 = vld [vmem:[%s349 + $0x4] sm:$0xf]
        %v367 = vld [vmem:[%s349 + $0x8] sm:$0xf]
        %v368 = vld [vmem:[%s349 + $0xc] sm:$0xf]
        %v377 = vunpack.c.l.b16 %v357
        %v378 = vunpack.c.l.b16 %v358
        %v379 = vunpack.c.l.b16 %v359
        %v380 = vunpack.c.l.b16 %v360
        %v381 = vunpack.c.l.b16 %v361
        %v382 = vunpack.c.l.b16 %v362
        %v383 = vunpack.c.l.b16 %v363
        %v384 = vunpack.c.l.b16 %v364
        %v385 = vpack.c.b16 %v378, %v377
        %v386 = vpack.c.b16 %v380, %v379
        %v387 = vpack.c.b16 %v382, %v381
        %v388 = vpack.c.b16 %v384, %v383
        %v393 = vunpack.c.l.b16 %v365
        %v394 = vunpack.c.l.b16 %v366
        %v395 = vunpack.c.l.b16 %v367
        %v396 = vunpack.c.l.b16 %v368
        %v397 = vpack.c.b16 %v394, %v393
        %v398 = vpack.c.b16 %v396, %v395
        %vm401 = vcmask 261120
        %v403 = vsel %vm401, %v385, 0
        %v406 = vsel %vm401, %v386, 0
        %v409 = vsel %vm401, %v387, 0
        %v412 = vsel %vm401, %v388, 0
        %414 = vmatprep.subr.bf16.mxu0 0
        %415 = vmatpush1.bf16.msra.mxu0 %v397
        %416 = vmatprep.subr.bf16.mxu0 0
        %417 = vmatpush1.bf16.msra.mxu0 %v398
        %418 = vmatprep.subr.bf16.mxu0 0
        %419 = vmatpush1.bf16.msra.mxu0 0
        %420 = vmatprep.subr.bf16.mxu0 0
        %421 = vmatpush1.bf16.msra.mxu0 0
        %422 = vmatprep.subr.bf16.mxu0 0
        %423 = vmatpush1.bf16.msra.mxu0 0
        %424 = vmatprep.subr.bf16.mxu0 0
        %425 = vmatpush1.bf16.msra.mxu0 0
        %426 = vmatprep.subr.bf16.mxu0 0
        %427 = vmatpush1.bf16.msra.mxu0 0
        %428 = vmatprep.subr.bf16.mxu0 0
        %429 = vmatpush1.bf16.msra.mxu0 0
        %430 = vmatprep.subr.bf16.mxu0 0
        %431 = vmatpush1.bf16.msra.mxu0 0
        %432 = vmatprep.subr.bf16.mxu0 0
        %433 = vmatpush1.bf16.msra.mxu0 0
        %434 = vmatprep.subr.bf16.mxu0 0
        %435 = vmatpush1.bf16.msra.mxu0 0
        %436 = vmatprep.subr.bf16.mxu0 0
        %437 = vmatpush1.bf16.msra.mxu0 0
        %438 = vmatprep.subr.bf16.mxu0 0
        %439 = vmatpush1.bf16.msra.mxu0 0
        %440 = vmatprep.subr.bf16.mxu0 0
        %441 = vmatpush1.bf16.msra.mxu0 0
        %442 = vmatprep.subr.bf16.mxu0 0
        %443 = vmatpush1.bf16.msra.mxu0 0
        %444 = vmatprep.subr.bf16.mxu0 0
        %445 = vmatpush1.bf16.msra.mxu0 0
        %446 = vmatprep.mubr.bf16.mxu0 0
        %447 = vmatmul.mubr.bf16.gmra.mrb[0].mxu0 %v403
        %v448 = vpop.f32.mrb[0].mxu0
        %v449 = vadd.f32 0.0, %v448
        %v450 = vpop.f32.mrb[0].mxu0
        %v451 = vpop.f32.mrb[0].mxu0
        %v452 = vadd.f32 0.0, %v451
        %v453 = vpop.f32.mrb[0].mxu0
        %454 = vmatprep.mubr.bf16.mxu0 0
        %455 = vmatmul.mubr.bf16.gmra.mrb[0].mxu0 %v406
        %v456 = vpop.f32.mrb[0].mxu0
        %v457 = vadd.f32 0.0, %v456
        %v458 = vpop.f32.mrb[0].mxu0
        %v459 = vpop.f32.mrb[0].mxu0
        %v460 = vadd.f32 0.0, %v459
        %v461 = vpop.f32.mrb[0].mxu0
        %462 = vmatprep.mubr.bf16.mxu0 0
        %463 = vmatmul.mubr.bf16.gmra.mrb[0].mxu0 %v409
        %v464 = vpop.f32.mrb[0].mxu0
        %v465 = vadd.f32 0.0, %v464
        %v466 = vpop.f32.mrb[0].mxu0
        %v467 = vpop.f32.mrb[0].mxu0
        %v468 = vadd.f32 0.0, %v467
        %v469 = vpop.f32.mrb[0].mxu0
        %470 = vmatprep.mubr.bf16.mxu0 0
        %471 = vmatmul.mubr.bf16.gmra.mrb[0].mxu0 %v412
        %v472 = vpop.f32.mrb[0].mxu0
        %v473 = vadd.f32 0.0, %v472
        %v474 = vpop.f32.mrb[0].mxu0
        %v475 = vpop.f32.mrb[0].mxu0
        %v476 = vadd.f32 0.0, %v475
        %v477 = vpop.f32.mrb[0].mxu0
        %478 = vdwg.mxu0
        %v479 = vpack.c.bf16 %v452, %v449
        %v480 = vpack.c.bf16 %v460, %v457
        %v481 = vpack.c.bf16 %v468, %v465
        %v482 = vpack.c.bf16 %v476, %v473
        %v487 = vunpack.c.l.b16 %v479
        %v488 = vunpack.c.h.b16 %v479
        %v489 = vunpack.c.l.b16 %v480
        %v490 = vunpack.c.h.b16 %v480
        %v491 = vunpack.c.l.b16 %v481
        %v492 = vunpack.c.h.b16 %v481
        %v493 = vunpack.c.l.b16 %v482
        %v494 = vunpack.c.h.b16 %v482
        %v495 = vpack.c.b16 %v487, %v487
        %v496 = vpack.c.b16 %v488, %v488
        %v497 = vpack.c.b16 %v489, %v489
        %v498 = vpack.c.b16 %v490, %v490
        %v499 = vpack.c.b16 %v491, %v491
        %v500 = vpack.c.b16 %v492, %v492
        %v501 = vpack.c.b16 %v493, %v493
        %v502 = vpack.c.b16 %v494, %v494
        %511 = vst [vmem:[%s319] sm:$0xf] %v495
        %512 = vst [vmem:[%s319 + $0x4] sm:$0xf] %v496
        %513 = vst [vmem:[%s319 + $0x8] sm:$0xf] %v497
        %514 = vst [vmem:[%s319 + $0xc] sm:$0xf] %v498
        %515 = vst [vmem:[%s319 + $0x10] sm:$0xf] %v499
        %516 = vst [vmem:[%s319 + $0x14] sm:$0xf] %v500
        %517 = vst [vmem:[%s319 + $0x18] sm:$0xf] %v501
        %518 = vst [vmem:[%s319 + $0x1c] sm:$0xf] %v502
        %v519 = vld [vmem:[%s275] sm:$0xff]
        %v520 = vld [vmem:[%s275 + $0x8] sm:$0xff]
        %v521 = vld [vmem:[%s275 + $0x10] sm:$0xff]
        %v522 = vld [vmem:[%s275 + $0x18] sm:$0xff]
        %v523 = vld [vmem:[%s275 + $0x20] sm:$0xff]
        %v524 = vld [vmem:[%s275 + $0x28] sm:$0xff]
        %v525 = vld [vmem:[%s275 + $0x30] sm:$0xff]
        %v526 = vld [vmem:[%s275 + $0x38] sm:$0xff]
        %v527 = vadd.f32 %v449, %v452
        %v528 = vadd.f32 %v527, %v457
        %v529 = vadd.f32 %v528, %v460
        %v530 = vadd.f32 %v529, %v465
        %v531 = vadd.f32 %v530, %v468
        %v532 = vadd.f32 %v531, %v473
        %v533 = vadd.f32 %v532, %v476
        %v534 = vrot.slane %v533, 4
        %v535 = vadd.f32 %v533, %v534
        %v536 = vrot.slane %v535, 2
        %v537 = vadd.f32 %v535, %v536
        %v538 = vrot.slane %v537, 1
        %v539 = vadd.f32 %v537, %v538
        %v540 = vadd.f32 %v519, %v520
        %v541 = vadd.f32 %v540, %v521
        %v542 = vadd.f32 %v541, %v522
        %v543 = vadd.f32 %v542, %v523
        %v544 = vadd.f32 %v543, %v524
        %v545 = vadd.f32 %v544, %v525
        %v546 = vadd.f32 %v545, %v526
        %v547 = vrot.slane %v546, 4
        %v548 = vadd.f32 %v546, %v547
        %v549 = vrot.slane %v548, 2
        %v550 = vadd.f32 %v548, %v549
        %v551 = vrot.slane %v550, 1
        %v552 = vadd.f32 %v550, %v551
        %v555 = vcombine.low %v539, %v552
        %v557 = vunpack.c.l.s4 1966171168
        %v558 = vunpack.c.0.s8 %v557
        %v559 = vlaneseq
        %v560 = vshrl.u32 %v559, 7
        %v561 = vsub.s32 %v558, %v560
        %v562 = vrot.slane %v555, %v561
        %v564 = vunpack.c.l.s4 1966171168
        %v565 = vunpack.c.0.s8 %v564
        %v566 = vlaneseq
        %v567 = vshrl.u32 %v566, 7
        %v568 = vsub.s32 %v565, %v567
        %v569 = vrot.slane %v562, %v568
        %v571 = vlaneseq
        %vm572 = vcmp.ge.s32.totalorder %v571, 0
        %vm573 = vcmp.lt.s32.totalorder %v571, 256
        %vm574 = vmand %vm572, %vm573
        %575 = vst.msk [vmem:[%s326] ss:$2 sm:$0x3] %vm574, %v569
        %v576 = vmul.f32 %v449, %v449
        %v577 = vmul.f32 %v452, %v452
        %v578 = vmul.f32 %v457, %v457
        %v579 = vmul.f32 %v460, %v460
        %v580 = vmul.f32 %v465, %v465
        %v581 = vmul.f32 %v468, %v468
        %v582 = vmul.f32 %v473, %v473
        %v583 = vmul.f32 %v476, %v476
        %v584 = vadd.f32 %v576, %v577
        %v585 = vadd.f32 %v584, %v578
        %v586 = vadd.f32 %v585, %v579
        %v587 = vadd.f32 %v586, %v580
        %v588 = vadd.f32 %v587, %v581
        %v589 = vadd.f32 %v588, %v582
        %v590 = vadd.f32 %v589, %v583
        %v591 = vrot.slane %v590, 4
        %v592 = vadd.f32 %v590, %v591
        %v593 = vrot.slane %v592, 2
        %v594 = vadd.f32 %v592, %v593
        %v595 = vrot.slane %v594, 1
        %v596 = vadd.f32 %v594, %v595
        %v597 = vmul.f32 %v519, %v519
        %v598 = vmul.f32 %v520, %v520
        %v599 = vmul.f32 %v521, %v521
        %v600 = vmul.f32 %v522, %v522
        %v601 = vmul.f32 %v523, %v523
        %v602 = vmul.f32 %v524, %v524
        %v603 = vmul.f32 %v525, %v525
        %v604 = vmul.f32 %v526, %v526
        %v605 = vadd.f32 %v597, %v598
        %v606 = vadd.f32 %v605, %v599
        %v607 = vadd.f32 %v606, %v600
        %v608 = vadd.f32 %v607, %v601
        %v609 = vadd.f32 %v608, %v602
        %v610 = vadd.f32 %v609, %v603
        %v611 = vadd.f32 %v610, %v604
        %v612 = vrot.slane %v611, 4
        %v613 = vadd.f32 %v611, %v612
        %v614 = vrot.slane %v613, 2
        %v615 = vadd.f32 %v613, %v614
        %v616 = vrot.slane %v615, 1
        %v617 = vadd.f32 %v615, %v616
        %v620 = vcombine.low %v596, %v617
        %v622 = vunpack.c.l.s4 1966171168
        %v623 = vunpack.c.0.s8 %v622
        %v624 = vlaneseq
        %v625 = vshrl.u32 %v624, 7
        %v626 = vsub.s32 %v623, %v625
        %v627 = vrot.slane %v620, %v626
        %v629 = vunpack.c.l.s4 1966171168
        %v630 = vunpack.c.0.s8 %v629
        %v631 = vlaneseq
        %v632 = vshrl.u32 %v631, 7
        %v633 = vsub.s32 %v630, %v632
        %v634 = vrot.slane %v627, %v633
        %s636 = scalar_lea.vmem %s326, 1 [#allocation6]
        %637 = vst.msk [vmem:[%s636] ss:$2 sm:$0x3] %vm574, %v634
        %s638 = sand.u32 %s148, 1
        %s639 = scalar_lea.sflag [#allocation4], %s638
        %s640 = sand.u32 %s148, 1
        %s641 = smul.addr %s640, 32
        %s642 = scalar_lea.vmem [#allocation5], %s641
        %s643 = sand.u32 %s178, 1
        %s644 = scalar_lea.sflag [#allocation7], %s643
        %s645 = sand.u32 %s178, 1
        %s646 = smul.addr %s645, 4
        %s647 = scalar_lea.vmem [#allocation6], %s646
        // Predicated region
        $region37: #{tpu_custom_call.1} parent=31 // pred_check
          %p648 = pneg %p158
        $region38: #{tpu_custom_call.1} parent=31 // pred_check_branch
          %650 = sbr.rel (%p648) target = $region40
        $region39: #{tpu_custom_call.1} parent=31 // pred_region
          %s651 = smul.u32 8, %s32
          %s653 = ssub.s32 512, 512
          %654 = vsyncadd %s639, %s653
          %s655 = smul.addr %s31, 16
          %s656 = sadd.s32 %s651, %s655
          %s657 = smul.addr %s30, 32
          %s658 = sadd.s32 %s656, %s657
          %s659 = smul.addr %s658, 64
          %s660 = scalar_lea.hbm %s3, %s659
          %s661 = sshll.u32 %s642, 4
          %s662 = int_to_ptr.vmem [resolvable:$true] %s661
          %667 = dma.vmem_to_hbm [thread:$0]  %s662, 512, %s660, %s639, 64, 64, 4
        $region40: #{tpu_custom_call.1} parent=31 // pred_fallthru
          _
        // Predicated region
        $region41: #{tpu_custom_call.1} parent=31 // pred_check
          %p668 = pneg %p188
        $region42: #{tpu_custom_call.1} parent=31 // pred_check_branch
          %670 = sbr.rel (%p668) target = $region44
        $region43: #{tpu_custom_call.1} parent=31 // pred_region
          %s672 = ssub.s32 64, 64
          %673 = vsyncadd %s644, %s672
          %s674 = smul.addr %s32, 2
          %s675 = smul.addr %s31, 4
          %s676 = sadd.s32 %s674, %s675
          %s677 = smul.addr %s30, 8
          %s678 = sadd.s32 %s676, %s677
          %s679 = smul.addr %s678, 32
          %s680 = scalar_lea.hbm %s4, %s679
          %s682 = sshll.u32 %s647, 4
          %s683 = int_to_ptr.vmem [resolvable:$true] %s682
          %685 = dma.vmem_to_hbm [thread:$0]  %s683, 64, %s680, %s644
        $region44: #{tpu_custom_call.1} parent=31 // pred_fallthru
          _
      $region32: #{tpu_custom_call.1} parent=5 // pred_fallthru
        _
      %p686 = scmp.le.s32.totalorder 2, %s20
      // Predicated region
      $region45: #{tpu_custom_call.1} parent=5 // pred_check
        %p687 = pneg %p686
      $region46: #{tpu_custom_call.1} parent=5 // pred_check_branch
        %689 = sbr.rel (%p687) target = $region48
      $region47: #{tpu_custom_call.1} parent=5 // pred_region
        %s690 = ssub.s32 %s20, 2
        // Predicated region
        $region49: #{tpu_custom_call.1} parent=47 // pred_check
          %p691 = pneg %p164
        $region50: #{tpu_custom_call.1} parent=47 // pred_check_branch
          %693 = sbr.rel (%p691) target = $region52
        $region51: #{tpu_custom_call.1} parent=47 // pred_region
          %s694 = sand.u32 %s149, 1
          %s695 = scalar_lea.sflag [#allocation4], %s694
          %s696 = sand.u32 %s149, 1
          %s697 = smul.addr %s696, 32
          %s698 = scalar_lea.vmem [#allocation5], %s697
          %699 = dma.done %s695, 512
        $region52: #{tpu_custom_call.1} parent=47 // pred_fallthru
          _
        // Predicated region
        $region53: #{tpu_custom_call.1} parent=47 // pred_check
          %p700 = pneg %p194
        $region54: #{tpu_custom_call.1} parent=47 // pred_check_branch
          %702 = sbr.rel (%p700) target = $region56
        $region55: #{tpu_custom_call.1} parent=47 // pred_region
          %s703 = sand.u32 %s179, 1
          %s704 = scalar_lea.sflag [#allocation7], %s703
          %s705 = sand.u32 %s179, 1
          %s706 = smul.addr %s705, 4
          %s707 = scalar_lea.vmem [#allocation6], %s706
          %708 = dma.done %s704, 64
        $region56: #{tpu_custom_call.1} parent=47 // pred_fallthru
          _
      $region48: #{tpu_custom_call.1} parent=5 // pred_fallthru
        _
    $region6: #{tpu_custom_call.1} parent=1 // loop_footer
      %s24 = sadd.s32 1, %s20
    $region7: #{tpu_custom_call.1} parent=1 // loop_footer_branch
      %19 = sbr.rel target = $region3
    $region8: #{tpu_custom_call.1} parent=1 // loop_exit
      _
    %709 = vsyncpa [#allocation3], 1
    %s710 = scalar_lea.sflag [#allocation3], 1
    %711 = vsyncpa %s710, 1
    %712 = vsyncpa [#allocation4], 1
    %s713 = scalar_lea.sflag [#allocation4], 1
    %714 = vsyncpa %s713, 1
    %715 = vsyncpa [#allocation7], 1
    %s716 = scalar_lea.sflag [#allocation7], 1
    %717 = vsyncpa %s716, 1

</llo_original>
